<compile_context>
chip_gen: v7x
topology: tpu7x:2x2x1
jax: 0.10.0
libtpu: 0.0.40
codegen_flags: <defaults>
</compile_context>

<pallas_src>
import functools

import jax
import jax.numpy as jnp
from jax.experimental import pallas as pl
from jax.experimental.pallas import tpu as pltpu


# ----------------------------------------------------------------------------
# Pallas kernels (elementwise hot path) — block shape (1, C, TR, LANE)
# ----------------------------------------------------------------------------
def _occlude_kernel(img_ref, occ_ref, out_ref, *, fill, invert):
    """Non-'natural' compositing. `fill` is a static tuple of Python floats."""
    if len(set(fill)) == 1:
        # Uniform fill colour: one whole-tile expression / store.
        img = img_ref[...]                               # (1, C, TR, LANE)
        occ = occ_ref[...]
        paint = occ if invert else (1.0 - occ)           # fraction painted w/ fill
        # out = img*(1-paint) + fill*paint  ==  img + paint*(fill - img)
        out_ref[...] = img + paint * (fill[0] - img)
    else:
        # Per-channel scalar fill — no (1,C,1,1) constant array is built.
        for c, f in enumerate(fill):
            img_c = img_ref[:, c, :, :]                  # (1, TR, LANE)
            occ_c = occ_ref[:, c, :, :]
            paint = occ_c if invert else (1.0 - occ_c)
            out_ref[:, c, :, :] = img_c + paint * (f - img_c)


def _natural_kernel(img_ref, occ_ref, out_ref):
    """'natural' method: binarise occluder by its channel-sum, then composite."""
    img = img_ref[...]                                   # (1, C, TR, LANE)
    occ = occ_ref[...]
    keep_img = jnp.sum(occ, axis=1, keepdims=True) >= 3.0
    out_ref[...] = jnp.where(keep_img, img, occ)


# ----------------------------------------------------------------------------
# VMEM-aware tiling plan + lane-dense slab reshape
# ----------------------------------------------------------------------------
_LANE_CAP = 1024                     # lanes per tile (multiple of 128)


def _vmem_plan():
    """Per-stream tile budget + vmem limit derived from the actual chip."""
    try:
        vmem = int(pltpu.get_tpu_info().vmem_capacity_bytes)
    except Exception:
        vmem = 64 * 1024 * 1024      # conservative (v7x physical)
    # 3 streams (img, occ, out) x 2 buffers, using ~2/3 of physical VMEM.
    per_stream = (2 * vmem // 3) // 6
    per_stream = max(2 * 1024 * 1024, min(per_stream, 8 * 1024 * 1024))
    vmem_limit = min(vmem - 8 * 1024 * 1024, 6 * per_stream + 8 * 1024 * 1024)
    return per_stream, vmem_limit


_PER_STREAM_TILE_BYTES, _VMEM_LIMIT_BYTES = _vmem_plan()


def _plan(C, P, itemsize, N):
    """Choose (lane, row_tile) for a flattened per-channel axis of length P."""
    lane = 128
    while lane < _LANE_CAP and P >= lane * 2:
        lane *= 2
    r = pl.cdiv(P, lane)
    if r <= 8:
        # Block second-to-last dim equals the full dim -> legal without padding.
        return lane, r
    max_tr = max(8, _PER_STREAM_TILE_BYTES // (C * lane * itemsize))
    tr = 8
    while tr * 2 <= max_tr and tr * 2 <= r:
        tr *= 2
    # v7x dual-TC: keep at least 2 parallel grid steps when there is no batch.
    if N == 1:
        while tr > 8 and pl.cdiv(r, tr) < 2:
            tr //= 2
    return lane, tr


def _to_slab(x, lane, r):
    """(N, C, H, W) -> (N, C, r, lane); zero-pads only the lane tail if needed."""
    N, C, H, W = x.shape
    P = H * W
    flat = x.reshape(N, C, P)
    pad = r * lane - P
    if pad:
        flat = jnp.pad(flat, ((0, 0), (0, 0), (0, pad)))
    return flat.reshape(N, C, r, lane)


def _run_tiled(kernel, image, occ):
    """Shared pallas_call wrapper for both compositing kernels."""
    squeeze = image.ndim == 3
    if squeeze:
        image = image[None]
    shared_occ = occ.ndim == 3       # one occluder shared across the batch
    if shared_occ:
        occ = occ[None]
    N, C, H, W = image.shape
    if occ.shape[-3:] != (C, H, W):
        raise ValueError("Occluder and image are different sizes!")
    occ = occ.astype(image.dtype)

    P = H * W
    lane, tr = _plan(C, P, image.dtype.itemsize, N)
    r = pl.cdiv(P, lane)
    img_s = _to_slab(image, lane, r)
    occ_s = _to_slab(occ, lane, r)

    # Grid: (row_tiles, N) — batch innermost so a shared occluder block index
    # is unchanged across consecutive steps (its DMA gets skipped).
    rt = pl.cdiv(r, tr)
    img_spec = pl.BlockSpec((1, C, tr, lane), lambda i, n: (n, 0, i, 0))
    occ_idx = (lambda i, n: (0, 0, i, 0)) if shared_occ else (lambda i, n: (n, 0, i, 0))
    occ_spec = pl.BlockSpec((1, C, tr, lane), occ_idx)

    out = pl.pallas_call(
        kernel,
        out_shape=jax.ShapeDtypeStruct(img_s.shape, image.dtype),
        grid=(rt, N),
        in_specs=[img_spec, occ_spec],
        out_specs=img_spec,
        compiler_params=pltpu.CompilerParams(
            dimension_semantics=("parallel", "parallel"),
            vmem_limit_bytes=_VMEM_LIMIT_BYTES,
        ),
    )(img_s, occ_s)

    out = out.reshape(N, C, r * lane)[:, :, :P].reshape(N, C, H, W)
    return out[0] if squeeze else out


def occlude_pallas(image, occ, fill_colour, invert):
    kernel = functools.partial(
        _occlude_kernel,
        fill=tuple(float(c) for c in fill_colour),
        invert=bool(invert),
    )
    return _run_tiled(kernel, image, occ)


def occlude_natural_pallas(image, occ):
    return _run_tiled(_natural_kernel, image, occ)


# ----------------------------------------------------------------------------
# Deterministic synthetic occluders (replaces the random .png load on disk)
# ----------------------------------------------------------------------------
def make_occluder(method, coverage, shape, key):
    """Returns a CHW float32 occluder. For non-'natural' methods the mask is
    1 where the image is kept and 0 where it is occluded (fraction ~coverage)."""
    C, H, W = shape
    if method == "natural":
        # White background (sum==3 -> keep image) with a pseudo-random coloured
        # patch in the centre (sum<3 -> occluded pixels replaced by occluder RGB).
        occ = jnp.ones((C, H, W), jnp.float32)
        h0, w0 = H // 4, W // 4
        patch = jax.random.uniform(key, (C, H - 2 * h0, W - 2 * w0),
                                   jnp.float32, 0.0, 0.9)
        occ = occ.at[:, h0:H - h0, w0:W - w0].set(patch)
        return occ
    # barHorz-style: horizontal bars, period 4 rows, `coverage` fraction occluded.
    period = 4
    n_occ = int(round(coverage * period))
    rows = jnp.arange(H)
    keep_row = jnp.where((rows % period) < n_occ, 0.0, 1.0)      # 0 = occluded
    return jnp.broadcast_to(keep_row[None, :, None], (C, H, W)).astype(jnp.float32)
    # TODO(synk): 'polkadot' / 'orientedNoise' patterns are file-defined; only
    # barHorz-like bars are synthesised here (compositing math is identical).


# ----------------------------------------------------------------------------
# Module-equivalent wrapper
# ----------------------------------------------------------------------------
class OccludeImage:
    def __init__(self, method, coverage, colour, invert):
        self.method = method
        self.coverage = coverage
        self.colour = colour
        self.invert = invert

    def __call__(self, image, key):
        chw = image.shape[-3:]
        occ = make_occluder(self.method, self.coverage, chw, key)
        # NOTE: the occluder is NOT broadcast to the batch — the kernel wrapper
        # dedupes it via a batch-invariant BlockSpec index_map.
        if self.method == "natural":
            return occlude_natural_pallas(image, occ)
        # TODO(synk): original picks a random colour from a list; use the first
        # entry deterministically here.
        col = self.colour[0] if isinstance(self.colour, list) else self.colour
        return occlude_pallas(image, occ, tuple(col), self.invert)


# ----------------------------------------------------------------------------
# Pure-JAX references for verification
# ----------------------------------------------------------------------------
def ref_occlude(image, occ, fill, invert):
    fill = fill.reshape(-1, 1, 1)
    if invert:
        return image * (1.0 - occ) + fill * occ
    return image * occ + fill * (1.0 - occ)


def ref_natural(image, occ):
    b = jnp.where(occ.sum(-3, keepdims=True) < 3.0, 1.0, 0.0)
    return image * (1.0 - b) + occ * b


if __name__ == "__main__":
    key = jax.random.PRNGKey(0)
    k_img, k_occ, k_batch = jax.random.split(key, 3)

    C, H, W = 3, 16, 16
    image = jax.random.uniform(k_img, (C, H, W), jnp.float32)     # 0..1 image, CHW
    occ = make_occluder("barHorz", 0.5, (C, H, W), k_occ)

    # --- barHorz occlusion, coverage 0.5, black fill, no invert --------------
    mod = OccludeImage(method="barHorz", coverage=0.5, colour=(0, 0, 0), invert=False)
    out = jax.block_until_ready(mod(image, k_occ))
    exp = ref_occlude(image, occ, jnp.asarray((0, 0, 0), jnp.float32), False)
    assert jnp.allclose(out, exp, atol=1e-6), "barHorz mismatch"

    # --- inverted occlusion with a non-uniform fill colour ---------------------
    mod_inv = OccludeImage(method="barHorz", coverage=0.5, colour=(255, 0, 128),
                           invert=True)
    out_inv = jax.block_until_ready(mod_inv(image, k_occ))
    exp_inv = ref_occlude(image, occ, jnp.asarray((255, 0, 128), jnp.float32), True)
    assert jnp.allclose(out_inv, exp_inv, atol=1e-4), "invert mismatch"

    # --- 'natural' occluder path ----------------------------------------------
    mod_nat = OccludeImage(method="natural", coverage=0.5, colour=(0, 0, 0),
                           invert=False)
    out_nat = jax.block_until_ready(mod_nat(image, k_occ))
    occ_nat = make_occluder("natural", 0.5, (C, H, W), k_occ)
    exp_nat = ref_natural(image, occ_nat)
    assert jnp.allclose(out_nat, exp_nat, atol=1e-6), "natural mismatch"

    # --- batched path (N, C, H, W): shared occluder, one pallas_call ----------
    batch = jax.random.uniform(k_batch, (2, C, H, W), jnp.float32)
    out_b = jax.block_until_ready(mod(batch, k_occ))
    exp_b = ref_occlude(batch, occ, jnp.asarray((0, 0, 0), jnp.float32), False)
    assert jnp.allclose(out_b, exp_b, atol=1e-6), "batched mismatch"

    # --- non-128-multiple spatial size (exercises lane-tail padding) ----------
    C2, H2, W2 = 3, 24, 40
    image2 = jax.random.uniform(k_img, (C2, H2, W2), jnp.float32)
    occ2 = make_occluder("barHorz", 0.5, (C2, H2, W2), k_occ)
    out2 = jax.block_until_ready(
        occlude_pallas(image2, occ2, (32.0, 64.0, 96.0), False))
    exp2 = ref_occlude(image2, occ2, jnp.asarray((32.0, 64.0, 96.0), jnp.float32),
                       False)
    assert jnp.allclose(out2, exp2, atol=1e-5), "padded-shape mismatch"

    # --- per-image (4-D) occluder path still works ------------------------------
    occ_per = jnp.stack([occ, 1.0 - occ])
    out_p = jax.block_until_ready(occlude_pallas(batch, occ_per, (0.0, 0.0, 0.0), False))
    exp_p = jnp.stack([ref_occlude(batch[i], occ_per[i],
                                   jnp.zeros(3, jnp.float32), False) for i in range(2)])
    assert jnp.allclose(out_p, exp_p, atol=1e-6), "per-image occ mismatch"

    print("KERNEL_OK")
</pallas_src>

<mosaic_0001>
module attributes {stable_mosaic.version = 11 : i64} {
  func.func @_occlude_kernel(%arg0: i32, %arg1: i32, %arg2: memref<1x3x1x256xf32, #tpu.memory_space<vmem>>, %arg3: memref<1x3x1x256xf32, #tpu.memory_space<vmem>>, %arg4: memref<1x3x1x256xf32, #tpu.memory_space<vmem>>) attributes {dimension_semantics = [#tpu.dimension_semantics<parallel>, #tpu.dimension_semantics<parallel>], iteration_bounds = array<i64: 1, 1>, scalar_prefetch = 0 : i64, scratch_operands = 0 : i64, tpu.core_type = #tpu.core_type<tc>, window_params = [{transform_indices = @transform_0, window_bounds = array<i64: 1, 3, 1, 256>}, {transform_indices = @transform_1, window_bounds = array<i64: 1, 3, 1, 256>}, {transform_indices = @transform_2, window_bounds = array<i64: 1, 3, 1, 256>}]} {
    %c0 = arith.constant 0 : index
    %c0_0 = arith.constant 0 : index
    %c0_1 = arith.constant 0 : index
    %c0_2 = arith.constant 0 : index
    %0 = vector.load %arg2[%c0, %c0_0, %c0_1, %c0_2] : memref<1x3x1x256xf32, #tpu.memory_space<vmem>>, vector<1x3x1x256xf32>
    %c0_3 = arith.constant 0 : index
    %c0_4 = arith.constant 0 : index
    %c0_5 = arith.constant 0 : index
    %c0_6 = arith.constant 0 : index
    %1 = vector.load %arg3[%c0_3, %c0_4, %c0_5, %c0_6] : memref<1x3x1x256xf32, #tpu.memory_space<vmem>>, vector<1x3x1x256xf32>
    %cst = arith.constant 1.000000e+00 : f32
    %2 = vector.broadcast %cst : f32 to vector<1x3x1x256xf32>
    %3 = arith.subf %2, %1 : vector<1x3x1x256xf32>
    %cst_7 = arith.constant 0.000000e+00 : f32
    %4 = vector.broadcast %cst_7 : f32 to vector<1x3x1x256xf32>
    %5 = arith.subf %4, %0 : vector<1x3x1x256xf32>
    %6 = arith.mulf %3, %5 : vector<1x3x1x256xf32>
    %7 = arith.addf %0, %6 : vector<1x3x1x256xf32>
    %c0_8 = arith.constant 0 : index
    %c0_9 = arith.constant 0 : index
    %c0_10 = arith.constant 0 : index
    %c0_11 = arith.constant 0 : index
    %8 = vector.load %arg4[%c0_8, %c0_9, %c0_10, %c0_11] : memref<1x3x1x256xf32, #tpu.memory_space<vmem>>, vector<1x3x1x256xf32>
    tpu.vector_store %arg4[%c0_8, %c0_9, %c0_10, %c0_11], %7 {strides = array<i32>} : memref<1x3x1x256xf32, #tpu.memory_space<vmem>>, vector<1x3x1x256xf32>,
    return
  }
  func.func @transform_0(%arg0: i32, %arg1: i32) -> (i32, i32, i32, i32) {
    %c0_i32 = arith.constant 0 : i32
    %c0_i32_0 = arith.constant 0 : i32
    %c0_i32_1 = arith.constant 0 : i32
    return %arg1, %c0_i32, %arg0, %c0_i32_0 : i32, i32, i32, i32
  }
  func.func @transform_1(%arg0: i32, %arg1: i32) -> (i32, i32, i32, i32) {
    %c0_i32 = arith.constant 0 : i32
    %c0_i32_0 = arith.constant 0 : i32
    %c0_i32_1 = arith.constant 0 : i32
    %c0_i32_2 = arith.constant 0 : i32
    return %c0_i32, %c0_i32_0, %arg0, %c0_i32_1 : i32, i32, i32, i32
  }
  func.func @transform_2(%arg0: i32, %arg1: i32) -> (i32, i32, i32, i32) {
    %c0_i32 = arith.constant 0 : i32
    %c0_i32_0 = arith.constant 0 : i32
    %c0_i32_1 = arith.constant 0 : i32
    return %arg1, %c0_i32, %arg0, %c0_i32_0 : i32, i32, i32, i32
  }
}

</mosaic_0001>

<llo_original>
// kernel: tpu_custom_call.1
$region0: #{tpu_custom_call.1}
  #allocation0 [shape = 'u32[]', space=smem, size = 0x4, offset = 0x4, fixed_abs, tag = 'smem constant byte address 0x4 - core index']
  #allocation1 [shape = 'u32[144,128]{1,0:T(1,128)}', space=vmem, size = 0x12000, scoped, tag = 'internal scratch']
  %s0 = inlined_call_operand.hbm [shape: f32[1,3,1,256], index: 0, kind: input, shape index: {}]
  %s1 = inlined_call_operand.hbm [shape: f32[1,3,1,256], index: 1, kind: input, shape index: {}]
  %s2 = inlined_call_operand.hbm [shape: f32[1,3,1,256], index: 2, kind: output, shape index: {}]
  %s3 = sld [smem:[#allocation0]]
  $region26: #{tpu_custom_call.1} parent=0
    _
  %s5 = ssub.s32 1, %s3
  %s6 = scalar_select 0, %s5, %s3
  $region1: #{tpu_custom_call.1} parent=0
    #allocation2 [shape = 'u8[3072]{0}', space=vmem, size = 0xc00, scoped, tag = 'input window, operand 0, single buffered']
    #allocation3 [shape = 's32[1]{0}', space=sflag, size = 0x4, scoped, tag = 'scoped memory for tpu_custom_call.1']
    #allocation4 [shape = 's32[1]{0}', space=sflag, size = 0x4, scoped, tag = 'scoped memory for tpu_custom_call.1']
    #allocation5 [shape = 'u8[3072]{0}', space=vmem, size = 0xc00, scoped, tag = 'input window, operand 1, single buffered']
    #allocation6 [shape = 's32[1]{0}', space=sflag, size = 0x4, scoped, tag = 'scoped memory for tpu_custom_call.1']
    #allocation7 [shape = 'u8[3072]{0}', space=vmem, size = 0xc00, scoped, tag = 'output window, operand 0, single buffered']
    %7 = vsyncpa [#allocation3], 0
    %8 = vsyncpa [#allocation6], 0
    %9 = vsyncpa [#allocation4], 0
    // Predicated region
    $region2: #{tpu_custom_call.1} parent=1 // pred_check
      _
    $region3: #{tpu_custom_call.1} parent=1 // pred_check_branch
      %11 = sbr.rel (0) target = $region5
    $region4: #{tpu_custom_call.1} parent=1 // pred_region
      %s13 = ssub.s32 96, 96
      %14 = vsyncadd [#allocation3], %s13
      %s15 = sshll.u32 [#allocation2], 4
      %s16 = int_to_ptr.vmem [resolvable:$true] %s15
      %21 = dma.hbm_to_vmem [thread:$0]  %s0, 96, %s16, [#allocation3], 32, 32, 2
    $region5: #{tpu_custom_call.1} parent=1 // pred_fallthru
      _
    // Predicated region
    $region6: #{tpu_custom_call.1} parent=1 // pred_check
      _
    $region7: #{tpu_custom_call.1} parent=1 // pred_check_branch
      %23 = sbr.rel (0) target = $region9
    $region8: #{tpu_custom_call.1} parent=1 // pred_region
      %s25 = ssub.s32 96, 96
      %26 = vsyncadd [#allocation6], %s25
      %s27 = sshll.u32 [#allocation5], 4
      %s28 = int_to_ptr.vmem [resolvable:$true] %s27
      %33 = dma.hbm_to_vmem [thread:$0]  %s1, 96, %s28, [#allocation6], 32, 32, 2
    $region9: #{tpu_custom_call.1} parent=1 // pred_fallthru
      _
    // Predicated region
    $region10: #{tpu_custom_call.1} parent=1 // pred_check
      _
    $region11: #{tpu_custom_call.1} parent=1 // pred_check_branch
      %35 = sbr.rel (0) target = $region13
    $region12: #{tpu_custom_call.1} parent=1 // pred_region
      %36 = dma.done [#allocation3], 96
    $region13: #{tpu_custom_call.1} parent=1 // pred_fallthru
      _
    // Predicated region
    $region14: #{tpu_custom_call.1} parent=1 // pred_check
      _
    $region15: #{tpu_custom_call.1} parent=1 // pred_check_branch
      %38 = sbr.rel (0) target = $region17
    $region16: #{tpu_custom_call.1} parent=1 // pred_region
      %39 = dma.done [#allocation6], 96
    $region17: #{tpu_custom_call.1} parent=1 // pred_fallthru
      _
    %v40 = vld [vmem:[#allocation2] sm:$0x3]
    %v41 = vld [vmem:[#allocation2 + $0x2] sm:$0x3]
    %v42 = vld [vmem:[#allocation2 + $0x4] sm:$0x3]
    %v43 = vld [vmem:[#allocation5] sm:$0x3]
    %v44 = vld [vmem:[#allocation5 + $0x2] sm:$0x3]
    %v45 = vld [vmem:[#allocation5 + $0x4] sm:$0x3]
    %v46 = vsub.f32 1.0, %v43
    %v47 = vsub.f32 1.0, %v44
    %v48 = vsub.f32 1.0, %v45
    %v49 = vsub.f32 0.0, %v40
    %v50 = vsub.f32 0.0, %v41
    %v51 = vsub.f32 0.0, %v42
    %v52 = vmul.f32 %v46, %v49
    %v53 = vmul.f32 %v47, %v50
    %v54 = vmul.f32 %v48, %v51
    %v55 = vadd.f32 %v40, %v52
    %v56 = vadd.f32 %v41, %v53
    %v57 = vadd.f32 %v42, %v54
    %v58 = vlaneseq
    %vm59 = vcmp.ge.s32.totalorder %v58, 0
    %vm60 = vcmp.lt.s32.totalorder %v58, 256
    %vm61 = vmand %vm59, %vm60
    %62 = vst.msk [vmem:[#allocation7] sm:$0x3] %vm61, %v55
    %63 = vst.msk [vmem:[#allocation7 + $0x2] sm:$0x3] %vm61, %v56
    %64 = vst.msk [vmem:[#allocation7 + $0x4] sm:$0x3] %vm61, %v57
    // Predicated region
    $region18: #{tpu_custom_call.1} parent=1 // pred_check
      _
    $region19: #{tpu_custom_call.1} parent=1 // pred_check_branch
      %66 = sbr.rel (0) target = $region21
    $region20: #{tpu_custom_call.1} parent=1 // pred_region
      %s68 = ssub.s32 96, 96
      %69 = vsyncadd [#allocation4], %s68
      %s70 = sshll.u32 [#allocation7], 4
      %s71 = int_to_ptr.vmem [resolvable:$true] %s70
      %76 = dma.vmem_to_hbm [thread:$0]  %s71, 96, %s2, [#allocation4], 32, 32, 2
    $region21: #{tpu_custom_call.1} parent=1 // pred_fallthru
      _
    // Predicated region
    $region22: #{tpu_custom_call.1} parent=1 // pred_check
      _
    $region23: #{tpu_custom_call.1} parent=1 // pred_check_branch
      %78 = sbr.rel (0) target = $region25
    $region24: #{tpu_custom_call.1} parent=1 // pred_region
      %79 = dma.done [#allocation4], 96
    $region25: #{tpu_custom_call.1} parent=1 // pred_fallthru
      _
    %80 = vsyncpa [#allocation3], 1
    %81 = vsyncpa [#allocation6], 1
    %82 = vsyncpa [#allocation4], 1

</llo_original>
